<compile_context>
chip_gen: v7x
topology: tpu7x:2x2x1
jax: 0.10.0
libtpu: 0.0.40
codegen_flags: <defaults>
</compile_context>

<pallas_src>
import numpy as np
import jax
import jax.numpy as jnp
from jax.experimental import pallas as pl
from jax.experimental.pallas import tpu as pltpu


def _round_up(v, m):
    return ((v + m - 1) // m) * m


# ----------------------------- Pallas kernel ------------------------------- #

def cwt_kernel(wr_ref, wsh_ref, o_ref, slab_ref):
    """One time tile: in-VMEM im2col + (S, M) @ (M, TN) matmul + abs.

    wr_ref  : (S, M)  f32  tap-reversed wavelet bank (resident across the grid)
    wsh_ref : (8, WP) f32  sheared window, wsh[b, j] = x[tile0 - offL + j + b]
    o_ref   : (S, TN) f32  output tile
    slab_ref: (M, TN) f32  VMEM scratch holding the im2col slab
    """
    m_pad, tn = slab_ref.shape
    wsh = wsh_ref[...]                           # (8, WP) -- single load

    # Build slab[m', n'] = x[tile0 + n' - offL + m'] eight rows at a time:
    # rows 8a..8a+7 of the slab are exactly wsh[:, 8a : 8a+TN].  The python loop
    # is unrolled, so every slice start is a compile-time constant -> static lane
    # shifts + full-vreg stores, nothing touches HBM.
    for a in range(m_pad // 8):
        slab_ref[8 * a:8 * a + 8, :] = wsh[:, 8 * a:8 * a + tn]

    # Single MXU matmul (default precision: one bf16 pass, f32 accumulation).
    acc = jnp.dot(wr_ref[...], slab_ref[...], preferred_element_type=jnp.float32)
    o_ref[...] = jnp.abs(acc)


def cwt_pallas(x: jnp.ndarray, bank_rev: jnp.ndarray, taps: int) -> jnp.ndarray:
    """x: [T] f32 signal, bank_rev: [S, M_pad] tap-reversed (zero-padded) bank."""
    t_len = int(x.shape[0])
    s, m_pad = bank_rev.shape
    tn = 512 if t_len >= 512 else _round_up(t_len, 128)   # lane-dense time tile
    t_pad = _round_up(t_len, tn)
    grid = t_pad // tn
    wp = _round_up(tn + m_pad - 8, 128)
    off = (taps - 1) // 2                                  # np.convolve 'same'
    off_l = taps - 1 - off

    # Sheared per-tile windows: wsh[i, b, j] = x[i*TN - offL + j + b] (0 outside).
    # Total size ~ 8*(T + grid*M) elements -- tiny vs. the old [M, T] Toeplitz.
    base = jnp.arange(grid, dtype=jnp.int32)[:, None, None] * tn
    b_off = jnp.arange(8, dtype=jnp.int32)[None, :, None]
    j_off = jnp.arange(wp, dtype=jnp.int32)[None, None, :]
    idx = base + b_off + j_off - off_l
    valid = (idx >= 0) & (idx < t_len)
    wsh = jnp.where(valid, x[jnp.clip(idx, 0, t_len - 1)], 0.0).astype(jnp.float32)

    cost = pl.CostEstimate(
        flops=2 * s * m_pad * t_pad,
        transcendentals=0,
        bytes_accessed=4 * (grid * 8 * wp + s * m_pad + s * t_pad),
    )

    out = pl.pallas_call(
        cwt_kernel,
        out_shape=jax.ShapeDtypeStruct((s, t_pad), jnp.float32),
        grid=(grid,),
        in_specs=[
            pl.BlockSpec((s, m_pad), lambda i: (0, 0)),        # bank: resident
            pl.BlockSpec((None, 8, wp), lambda i: (i, 0, 0)),  # per-tile window
        ],
        out_specs=pl.BlockSpec((s, tn), lambda i: (0, i)),
        scratch_shapes=[pltpu.VMEM((m_pad, tn), jnp.float32)],
        compiler_params=pltpu.CompilerParams(
            dimension_semantics=("parallel",),   # independent time tiles (v7x 2 TCs)
        ),
        cost_estimate=cost,
    )(bank_rev, wsh)
    return out[:, :t_len]


# ------------------------------ glue (setup) -------------------------------- #

def morlet_bank(scales: np.ndarray, points: int) -> np.ndarray:
    """Real part of Morlet wavelets, matching the PyTorch module's get_wavelet."""
    w = 5.0
    t = np.arange(-points // 2, points // 2).astype(np.float64)
    bank = []
    for scale in scales:
        norm = 1.0 / (np.sqrt(scale) * np.pi ** 0.25)
        bank.append(norm * np.exp(-t ** 2 / (2.0 * scale ** 2)) * np.cos(w * t / scale))
    return np.stack(bank).astype(np.float32)                    # [S, M]


class ContinuousWaveletTransformPallas:
    """JAX/Pallas port of the PyTorch ContinuousWaveletTransform (forward only)."""

    def __init__(self, scales: int = 32, wavelet: str = "morlet"):
        if wavelet != "morlet":
            raise NotImplementedError(wavelet)
        self.scales = np.logspace(np.log10(0.1), np.log10(1.0), scales)
        self._bank_cache = {}          # taps -> device-resident reversed bank

    def _reversed_bank(self, taps: int) -> jnp.ndarray:
        key = int(taps)
        if key not in self._bank_cache:
            bank = morlet_bank(self.scales, taps)                # [S, M]
            m_pad = _round_up(taps, 8)
            rev = np.ascontiguousarray(bank[:, ::-1])            # correlation form
            if m_pad != taps:
                rev = np.pad(rev, ((0, 0), (0, m_pad - taps)))   # zero extra taps
            self._bank_cache[key] = jnp.asarray(rev, dtype=jnp.float32)
        return self._bank_cache[key]

    def __call__(self, x: jnp.ndarray) -> jnp.ndarray:
        # x: [time_steps] float -> out: [scales, time_steps] float32
        n_time = int(x.shape[0])
        # TODO(synk): like the original module, the wavelet is truncated to
        # min(T, 1024) taps for very long signals.
        taps = min(n_time, 1024)
        bank_rev = self._reversed_bank(taps)
        return cwt_pallas(x.astype(jnp.float32), bank_rev, taps)


# --------------------------------- main ------------------------------------- #

def _numpy_reference(x_np: np.ndarray, scales: np.ndarray) -> np.ndarray:
    """Pure-numpy reference mirroring the PyTorch module (np.convolve 'same'
    equals scipy.signal.convolve 'same' here since wavelet length <= len(x))."""
    n_time = len(x_np)
    taps = min(n_time, 1024)
    bank = morlet_bank(scales, taps).astype(np.float64)
    out = [np.abs(np.convolve(x_np.astype(np.float64), bank[s], mode="same"))
           for s in range(bank.shape[0])]
    return np.stack(out).astype(np.float32)


if __name__ == "__main__":
    key = jax.random.PRNGKey(0)
    time_steps = 128                          # small, TPU-lane-aligned sequence
    x = jax.random.normal(key, (time_steps,), dtype=jnp.float32)

    cwt = ContinuousWaveletTransformPallas(scales=32, wavelet="morlet")
    result = jax.block_until_ready(cwt(x))    # [32, 128] float32

    # Sanity check against a pure-numpy (float64) reference of the original module.
    ref = _numpy_reference(np.asarray(x), cwt.scales)
    assert result.shape == (32, time_steps)
    assert result.dtype == jnp.float32
    # Default MXU precision (single bf16 pass, f32 accumulate) per the perf
    # review -> ~1e-3..1e-2 absolute error on O(1..10) outputs; atol leaves
    # margin for positions with heavy cancellation.
    np.testing.assert_allclose(np.asarray(result), ref, rtol=1e-2, atol=5e-2)

    print("KERNEL_OK")
</pallas_src>

<mosaic_0001>
module attributes {stable_mosaic.version = 11 : i64} {
  func.func @cwt_kernel(%arg0: i32, %arg1: memref<32x128xf32, #tpu.memory_space<vmem>>, %arg2: memref<1x8x256xf32, #tpu.memory_space<vmem>>, %arg3: memref<32x128xf32, #tpu.memory_space<vmem>>, %arg4: memref<128x128xf32, #tpu.memory_space<vmem>>) attributes {dimension_semantics = [#tpu.dimension_semantics<parallel>], iteration_bounds = array<i64: 1>, scalar_prefetch = 0 : i64, scratch_operands = 1 : i64, tpu.core_type = #tpu.core_type<tc>, window_params = [{pipeline_mode = #tpu.pipeline_mode<synchronous>, transform_indices = @transform_0, window_bounds = array<i64: 32, 128>}, {transform_indices = @transform_1, window_bounds = array<i64: 1, 8, 256>}, {transform_indices = @transform_2, window_bounds = array<i64: 32, 128>}]} {
    %c0 = arith.constant 0 : index
    %c0_0 = arith.constant 0 : index
    %c0_1 = arith.constant 0 : index
    %0 = vector.load %arg2[%c0, %c0_0, %c0_1] : memref<1x8x256xf32, #tpu.memory_space<vmem>>, vector<1x8x256xf32>
    %1 = vector.shape_cast %0 : vector<1x8x256xf32> to vector<8x256xf32>
    %2 = vector.extract_strided_slice %1 {offsets = [0, 0], sizes = [8, 128], strides = [1, 1]} : vector<8x256xf32> to vector<8x128xf32>
    %c0_2 = arith.constant 0 : index
    %c0_3 = arith.constant 0 : index
    %3 = vector.load %arg4[%c0_2, %c0_3] : memref<128x128xf32, #tpu.memory_space<vmem>>, vector<8x128xf32>
    tpu.vector_store %arg4[%c0_2, %c0_3], %2 {strides = array<i32>} : memref<128x128xf32, #tpu.memory_space<vmem>>, vector<8x128xf32>,
    %4 = vector.extract_strided_slice %1 {offsets = [0, 8], sizes = [8, 128], strides = [1, 1]} : vector<8x256xf32> to vector<8x128xf32>
    %c8 = arith.constant 8 : index
    %c0_4 = arith.constant 0 : index
    %5 = vector.load %arg4[%c8, %c0_4] : memref<128x128xf32, #tpu.memory_space<vmem>>, vector<8x128xf32>
    tpu.vector_store %arg4[%c8, %c0_4], %4 {strides = array<i32>} : memref<128x128xf32, #tpu.memory_space<vmem>>, vector<8x128xf32>,
    %6 = vector.extract_strided_slice %1 {offsets = [0, 16], sizes = [8, 128], strides = [1, 1]} : vector<8x256xf32> to vector<8x128xf32>
    %c16 = arith.constant 16 : index
    %c0_5 = arith.constant 0 : index
    %7 = vector.load %arg4[%c16, %c0_5] : memref<128x128xf32, #tpu.memory_space<vmem>>, vector<8x128xf32>
    tpu.vector_store %arg4[%c16, %c0_5], %6 {strides = array<i32>} : memref<128x128xf32, #tpu.memory_space<vmem>>, vector<8x128xf32>,
    %8 = vector.extract_strided_slice %1 {offsets = [0, 24], sizes = [8, 128], strides = [1, 1]} : vector<8x256xf32> to vector<8x128xf32>
    %c24 = arith.constant 24 : index
    %c0_6 = arith.constant 0 : index
    %9 = vector.load %arg4[%c24, %c0_6] : memref<128x128xf32, #tpu.memory_space<vmem>>, vector<8x128xf32>
    tpu.vector_store %arg4[%c24, %c0_6], %8 {strides = array<i32>} : memref<128x128xf32, #tpu.memory_space<vmem>>, vector<8x128xf32>,
    %10 = vector.extract_strided_slice %1 {offsets = [0, 32], sizes = [8, 128], strides = [1, 1]} : vector<8x256xf32> to vector<8x128xf32>
    %c32 = arith.constant 32 : index
    %c0_7 = arith.constant 0 : index
    %11 = vector.load %arg4[%c32, %c0_7] : memref<128x128xf32, #tpu.memory_space<vmem>>, vector<8x128xf32>
    tpu.vector_store %arg4[%c32, %c0_7], %10 {strides = array<i32>} : memref<128x128xf32, #tpu.memory_space<vmem>>, vector<8x128xf32>,
    %12 = vector.extract_strided_slice %1 {offsets = [0, 40], sizes = [8, 128], strides = [1, 1]} : vector<8x256xf32> to vector<8x128xf32>
    %c40 = arith.constant 40 : index
    %c0_8 = arith.constant 0 : index
    %13 = vector.load %arg4[%c40, %c0_8] : memref<128x128xf32, #tpu.memory_space<vmem>>, vector<8x128xf32>
    tpu.vector_store %arg4[%c40, %c0_8], %12 {strides = array<i32>} : memref<128x128xf32, #tpu.memory_space<vmem>>, vector<8x128xf32>,
    %14 = vector.extract_strided_slice %1 {offsets = [0, 48], sizes = [8, 128], strides = [1, 1]} : vector<8x256xf32> to vector<8x128xf32>
    %c48 = arith.constant 48 : index
    %c0_9 = arith.constant 0 : index
    %15 = vector.load %arg4[%c48, %c0_9] : memref<128x128xf32, #tpu.memory_space<vmem>>, vector<8x128xf32>
    tpu.vector_store %arg4[%c48, %c0_9], %14 {strides = array<i32>} : memref<128x128xf32, #tpu.memory_space<vmem>>, vector<8x128xf32>,
    %16 = vector.extract_strided_slice %1 {offsets = [0, 56], sizes = [8, 128], strides = [1, 1]} : vector<8x256xf32> to vector<8x128xf32>
    %c56 = arith.constant 56 : index
    %c0_10 = arith.constant 0 : index
    %17 = vector.load %arg4[%c56, %c0_10] : memref<128x128xf32, #tpu.memory_space<vmem>>, vector<8x128xf32>
    tpu.vector_store %arg4[%c56, %c0_10], %16 {strides = array<i32>} : memref<128x128xf32, #tpu.memory_space<vmem>>, vector<8x128xf32>,
    %18 = vector.extract_strided_slice %1 {offsets = [0, 64], sizes = [8, 128], strides = [1, 1]} : vector<8x256xf32> to vector<8x128xf32>
    %c64 = arith.constant 64 : index
    %c0_11 = arith.constant 0 : index
    %19 = vector.load %arg4[%c64, %c0_11] : memref<128x128xf32, #tpu.memory_space<vmem>>, vector<8x128xf32>
    tpu.vector_store %arg4[%c64, %c0_11], %18 {strides = array<i32>} : memref<128x128xf32, #tpu.memory_space<vmem>>, vector<8x128xf32>,
    %20 = vector.extract_strided_slice %1 {offsets = [0, 72], sizes = [8, 128], strides = [1, 1]} : vector<8x256xf32> to vector<8x128xf32>
    %c72 = arith.constant 72 : index
    %c0_12 = arith.constant 0 : index
    %21 = vector.load %arg4[%c72, %c0_12] : memref<128x128xf32, #tpu.memory_space<vmem>>, vector<8x128xf32>
    tpu.vector_store %arg4[%c72, %c0_12], %20 {strides = array<i32>} : memref<128x128xf32, #tpu.memory_space<vmem>>, vector<8x128xf32>,
    %22 = vector.extract_strided_slice %1 {offsets = [0, 80], sizes = [8, 128], strides = [1, 1]} : vector<8x256xf32> to vector<8x128xf32>
    %c80 = arith.constant 80 : index
    %c0_13 = arith.constant 0 : index
    %23 = vector.load %arg4[%c80, %c0_13] : memref<128x128xf32, #tpu.memory_space<vmem>>, vector<8x128xf32>
    tpu.vector_store %arg4[%c80, %c0_13], %22 {strides = array<i32>} : memref<128x128xf32, #tpu.memory_space<vmem>>, vector<8x128xf32>,
    %24 = vector.extract_strided_slice %1 {offsets = [0, 88], sizes = [8, 128], strides = [1, 1]} : vector<8x256xf32> to vector<8x128xf32>
    %c88 = arith.constant 88 : index
    %c0_14 = arith.constant 0 : index
    %25 = vector.load %arg4[%c88, %c0_14] : memref<128x128xf32, #tpu.memory_space<vmem>>, vector<8x128xf32>
    tpu.vector_store %arg4[%c88, %c0_14], %24 {strides = array<i32>} : memref<128x128xf32, #tpu.memory_space<vmem>>, vector<8x128xf32>,
    %26 = vector.extract_strided_slice %1 {offsets = [0, 96], sizes = [8, 128], strides = [1, 1]} : vector<8x256xf32> to vector<8x128xf32>
    %c96 = arith.constant 96 : index
    %c0_15 = arith.constant 0 : index
    %27 = vector.load %arg4[%c96, %c0_15] : memref<128x128xf32, #tpu.memory_space<vmem>>, vector<8x128xf32>
    tpu.vector_store %arg4[%c96, %c0_15], %26 {strides = array<i32>} : memref<128x128xf32, #tpu.memory_space<vmem>>, vector<8x128xf32>,
    %28 = vector.extract_strided_slice %1 {offsets = [0, 104], sizes = [8, 128], strides = [1, 1]} : vector<8x256xf32> to vector<8x128xf32>
    %c104 = arith.constant 104 : index
    %c0_16 = arith.constant 0 : index
    %29 = vector.load %arg4[%c104, %c0_16] : memref<128x128xf32, #tpu.memory_space<vmem>>, vector<8x128xf32>
    tpu.vector_store %arg4[%c104, %c0_16], %28 {strides = array<i32>} : memref<128x128xf32, #tpu.memory_space<vmem>>, vector<8x128xf32>,
    %30 = vector.extract_strided_slice %1 {offsets = [0, 112], sizes = [8, 128], strides = [1, 1]} : vector<8x256xf32> to vector<8x128xf32>
    %c112 = arith.constant 112 : index
    %c0_17 = arith.constant 0 : index
    %31 = vector.load %arg4[%c112, %c0_17] : memref<128x128xf32, #tpu.memory_space<vmem>>, vector<8x128xf32>
    tpu.vector_store %arg4[%c112, %c0_17], %30 {strides = array<i32>} : memref<128x128xf32, #tpu.memory_space<vmem>>, vector<8x128xf32>,
    %32 = vector.extract_strided_slice %1 {offsets = [0, 120], sizes = [8, 128], strides = [1, 1]} : vector<8x256xf32> to vector<8x128xf32>
    %c120 = arith.constant 120 : index
    %c0_18 = arith.constant 0 : index
    %33 = vector.load %arg4[%c120, %c0_18] : memref<128x128xf32, #tpu.memory_space<vmem>>, vector<8x128xf32>
    tpu.vector_store %arg4[%c120, %c0_18], %32 {strides = array<i32>} : memref<128x128xf32, #tpu.memory_space<vmem>>, vector<8x128xf32>,
    %c0_19 = arith.constant 0 : index
    %c0_20 = arith.constant 0 : index
    %34 = vector.load %arg1[%c0_19, %c0_20] : memref<32x128xf32, #tpu.memory_space<vmem>>, vector<32x128xf32>
    %c0_21 = arith.constant 0 : index
    %c0_22 = arith.constant 0 : index
    %35 = vector.load %arg4[%c0_21, %c0_22] : memref<128x128xf32, #tpu.memory_space<vmem>>, vector<128x128xf32>
    %cst = arith.constant dense<0.000000e+00> : vector<32x128xf32>
    %36 = tpu.matmul %34, %35, %cst {dimension_numbers = #tpu.dot_dimension_numbers<[1], [0], [0], [1], [0, 0, 1, 1], [], []>} : vector<32x128xf32>, vector<128x128xf32>, vector<32x128xf32> -> vector<32x128xf32>
    %37 = math.absf %36 : vector<32x128xf32>
    %c0_23 = arith.constant 0 : index
    %c0_24 = arith.constant 0 : index
    %38 = vector.load %arg3[%c0_23, %c0_24] : memref<32x128xf32, #tpu.memory_space<vmem>>, vector<32x128xf32>
    tpu.vector_store %arg3[%c0_23, %c0_24], %37 {strides = array<i32>} : memref<32x128xf32, #tpu.memory_space<vmem>>, vector<32x128xf32>,
    return
  }
  func.func @transform_0(%arg0: i32) -> (i32, i32) {
    %c0_i32 = arith.constant 0 : i32
    %c0_i32_0 = arith.constant 0 : i32
    %c0_i32_1 = arith.constant 0 : i32
    return %c0_i32, %c0_i32_0 : i32, i32
  }
  func.func @transform_1(%arg0: i32) -> (i32, i32, i32) {
    %c0_i32 = arith.constant 0 : i32
    %c0_i32_0 = arith.constant 0 : i32
    %c0_i32_1 = arith.constant 0 : i32
    return %arg0, %c0_i32, %c0_i32_0 : i32, i32, i32
  }
  func.func @transform_2(%arg0: i32) -> (i32, i32) {
    %c0_i32 = arith.constant 0 : i32
    %c0_i32_0 = arith.constant 0 : i32
    return %c0_i32, %arg0 : i32, i32
  }
}

</mosaic_0001>

<llo_original>
// kernel: tpu_custom_call.1
$region0: #{tpu_custom_call.1}
  #allocation0 [shape = 'u32[]', space=smem, size = 0x4, offset = 0x4, fixed_abs, tag = 'smem constant byte address 0x4 - core index']
  #allocation1 [shape = 'u32[144,128]{1,0:T(1,128)}', space=vmem, size = 0x12000, scoped, tag = 'internal scratch']
  #allocation2 [shape = 'f32[128,128]{1,0:T(8,128)}', space=vmem, size = 0x10000, scoped, tag = 'scratch operand']
  %s0 = inlined_call_operand.hbm [shape: f32[32,128], index: 0, kind: input, shape index: {}]
  %s1 = inlined_call_operand.hbm [shape: f32[1,8,256], index: 1, kind: input, shape index: {}]
  %s2 = inlined_call_operand.hbm [shape: f32[32,128], index: 2, kind: output, shape index: {}]
  %s3 = sld [smem:[#allocation0]]
  $region26: #{tpu_custom_call.1} parent=0
    _
  %s5 = ssub.s32 1, %s3
  %s6 = scalar_select 0, %s5, %s3
  $region1: #{tpu_custom_call.1} parent=0
    #allocation3 [shape = 'u8[16384]{0}', space=vmem, size = 0x4000, scoped, tag = 'input window, operand 0, single buffered']
    #allocation4 [shape = 's32[1]{0}', space=sflag, size = 0x4, scoped, tag = 'scoped memory for tpu_custom_call.1']
    #allocation5 [shape = 's32[1]{0}', space=sflag, size = 0x4, scoped, tag = 'scoped memory for tpu_custom_call.1']
    #allocation6 [shape = 'u8[8192]{0}', space=vmem, size = 0x2000, scoped, tag = 'input window, operand 1, single buffered']
    #allocation7 [shape = 's32[1]{0}', space=sflag, size = 0x4, scoped, tag = 'scoped memory for tpu_custom_call.1']
    #allocation8 [shape = 'u8[16384]{0}', space=vmem, size = 0x4000, scoped, tag = 'output window, operand 0, single buffered']
    %7 = vsyncpa [#allocation4], 0
    %8 = vsyncpa [#allocation7], 0
    %9 = vsyncpa [#allocation5], 0
    // Predicated region
    $region2: #{tpu_custom_call.1} parent=1 // pred_check
      _
    $region3: #{tpu_custom_call.1} parent=1 // pred_check_branch
      %11 = sbr.rel (0) target = $region5
    $region4: #{tpu_custom_call.1} parent=1 // pred_region
      %s13 = ssub.s32 512, 512
      %14 = vsyncadd [#allocation4], %s13
      %s15 = sshll.u32 [#allocation3], 4
      %s16 = int_to_ptr.vmem [resolvable:$true] %s15
      %21 = dma.hbm_to_vmem [thread:$0]  %s0, 512, %s16, [#allocation4], 128, 128, 8
    $region5: #{tpu_custom_call.1} parent=1 // pred_fallthru
      _
    // Predicated region
    $region6: #{tpu_custom_call.1} parent=1 // pred_check
      _
    $region7: #{tpu_custom_call.1} parent=1 // pred_check_branch
      %23 = sbr.rel (0) target = $region9
    $region8: #{tpu_custom_call.1} parent=1 // pred_region
      %s25 = ssub.s32 256, 256
      %26 = vsyncadd [#allocation7], %s25
      %s28 = sshll.u32 [#allocation6], 4
      %s29 = int_to_ptr.vmem [resolvable:$true] %s28
      %31 = dma.hbm_to_vmem [thread:$0]  %s1, 256, %s29, [#allocation7]
    $region9: #{tpu_custom_call.1} parent=1 // pred_fallthru
      _
    // Predicated region
    $region10: #{tpu_custom_call.1} parent=1 // pred_check
      _
    $region11: #{tpu_custom_call.1} parent=1 // pred_check_branch
      %33 = sbr.rel (0) target = $region13
    $region12: #{tpu_custom_call.1} parent=1 // pred_region
      %34 = dma.done [#allocation4], 512
    $region13: #{tpu_custom_call.1} parent=1 // pred_fallthru
      _
    // Predicated region
    $region14: #{tpu_custom_call.1} parent=1 // pred_check
      _
    $region15: #{tpu_custom_call.1} parent=1 // pred_check_branch
      %36 = sbr.rel (0) target = $region17
    $region16: #{tpu_custom_call.1} parent=1 // pred_region
      %37 = dma.done [#allocation7], 256
    $region17: #{tpu_custom_call.1} parent=1 // pred_fallthru
      _
    %v38 = vld [vmem:[#allocation6] sm:$0xff]
    %v39 = vld [vmem:[#allocation6 + $0x8] sm:$0xff]
    %40 = vst [vmem:[#allocation2] sm:$0xff] %v38
    %43 = vrot.lane.b32.xlu0 %v38, 120
    %v44 = vpop.permute.xlu0 %43
    %45 = vrot.lane.b32.xlu0 %v39, 120
    %v46 = vpop.permute.xlu0 %45
    %vm47 = vcmask 982016
    %v48 = vsel %vm47, %v44, %v46
    %50 = vst [vmem:[#allocation2 + $0x8] sm:$0xff] %v48
    %51 = vrot.lane.b32.xlu0 %v38, 112
    %v52 = vpop.permute.xlu0 %51
    %53 = vrot.lane.b32.xlu0 %v39, 112
    %v54 = vpop.permute.xlu0 %53
    %vm55 = vcmask 916480
    %v56 = vsel %vm55, %v52, %v54
    %58 = vst [vmem:[#allocation2 + $0x10] sm:$0xff] %v56
    %59 = vrot.lane.b32.xlu0 %v38, 104
    %v60 = vpop.permute.xlu0 %59
    %61 = vrot.lane.b32.xlu0 %v39, 104
    %v62 = vpop.permute.xlu0 %61
    %vm63 = vcmask 850944
    %v64 = vsel %vm63, %v60, %v62
    %66 = vst [vmem:[#allocation2 + $0x18] sm:$0xff] %v64
    %67 = vrot.lane.b32.xlu0 %v38, 96
    %v68 = vpop.permute.xlu0 %67
    %69 = vrot.lane.b32.xlu0 %v39, 96
    %v70 = vpop.permute.xlu0 %69
    %vm71 = vcmask 785408
    %v72 = vsel %vm71, %v68, %v70
    %74 = vst [vmem:[#allocation2 + $0x20] sm:$0xff] %v72
    %75 = vrot.lane.b32.xlu0 %v38, 88
    %v76 = vpop.permute.xlu0 %75
    %77 = vrot.lane.b32.xlu0 %v39, 88
    %v78 = vpop.permute.xlu0 %77
    %vm79 = vcmask 719872
    %v80 = vsel %vm79, %v76, %v78
    %82 = vst [vmem:[#allocation2 + $0x28] sm:$0xff] %v80
    %83 = vrot.lane.b32.xlu0 %v38, 80
    %v84 = vpop.permute.xlu0 %83
    %85 = vrot.lane.b32.xlu0 %v39, 80
    %v86 = vpop.permute.xlu0 %85
    %vm87 = vcmask 654336
    %v88 = vsel %vm87, %v84, %v86
    %90 = vst [vmem:[#allocation2 + $0x30] sm:$0xff] %v88
    %91 = vrot.lane.b32.xlu0 %v38, 72
    %v92 = vpop.permute.xlu0 %91
    %93 = vrot.lane.b32.xlu0 %v39, 72
    %v94 = vpop.permute.xlu0 %93
    %vm95 = vcmask 588800
    %v96 = vsel %vm95, %v92, %v94
    %98 = vst [vmem:[#allocation2 + $0x38] sm:$0xff] %v96
    %99 = vrot.lane.b32.xlu0 %v38, 64
    %v100 = vpop.permute.xlu0 %99
    %101 = vrot.lane.b32.xlu0 %v39, 64
    %v102 = vpop.permute.xlu0 %101
    %vm103 = vcmask 523264
    %v104 = vsel %vm103, %v100, %v102
    %106 = vst [vmem:[#allocation2 + $0x40] sm:$0xff] %v104
    %107 = vrot.lane.b32.xlu0 %v38, 56
    %v108 = vpop.permute.xlu0 %107
    %109 = vrot.lane.b32.xlu0 %v39, 56
    %v110 = vpop.permute.xlu0 %109
    %vm111 = vcmask 457728
    %v112 = vsel %vm111, %v108, %v110
    %114 = vst [vmem:[#allocation2 + $0x48] sm:$0xff] %v112
    %115 = vrot.lane.b32.xlu0 %v38, 48
    %v116 = vpop.permute.xlu0 %115
    %117 = vrot.lane.b32.xlu0 %v39, 48
    %v118 = vpop.permute.xlu0 %117
    %vm119 = vcmask 392192
    %v120 = vsel %vm119, %v116, %v118
    %122 = vst [vmem:[#allocation2 + $0x50] sm:$0xff] %v120
    %123 = vrot.lane.b32.xlu0 %v38, 40
    %v124 = vpop.permute.xlu0 %123
    %125 = vrot.lane.b32.xlu0 %v39, 40
    %v126 = vpop.permute.xlu0 %125
    %vm127 = vcmask 326656
    %v128 = vsel %vm127, %v124, %v126
    %130 = vst [vmem:[#allocation2 + $0x58] sm:$0xff] %v128
    %131 = vrot.lane.b32.xlu0 %v38, 32
    %v132 = vpop.permute.xlu0 %131
    %133 = vrot.lane.b32.xlu0 %v39, 32
    %v134 = vpop.permute.xlu0 %133
    %vm135 = vcmask 261120
    %v136 = vsel %vm135, %v132, %v134
    %138 = vst [vmem:[#allocation2 + $0x60] sm:$0xff] %v136
    %139 = vrot.lane.b32.xlu0 %v38, 24
    %v140 = vpop.permute.xlu0 %139
    %141 = vrot.lane.b32.xlu0 %v39, 24
    %v142 = vpop.permute.xlu0 %141
    %vm143 = vcmask 195584
    %v144 = vsel %vm143, %v140, %v142
    %146 = vst [vmem:[#allocation2 + $0x68] sm:$0xff] %v144
    %147 = vrot.lane.b32.xlu0 %v38, 16
    %v148 = vpop.permute.xlu0 %147
    %149 = vrot.lane.b32.xlu0 %v39, 16
    %v150 = vpop.permute.xlu0 %149
    %vm151 = vcmask 130048
    %v152 = vsel %vm151, %v148, %v150
    %154 = vst [vmem:[#allocation2 + $0x70] sm:$0xff] %v152
    %155 = vrot.lane.b32.xlu0 %v38, 8
    %v156 = vpop.permute.xlu0 %155
    %157 = vrot.lane.b32.xlu0 %v39, 8
    %v158 = vpop.permute.xlu0 %157
    %vm159 = vcmask 64512
    %v160 = vsel %vm159, %v156, %v158
    %162 = vst [vmem:[#allocation2 + $0x78] sm:$0xff] %v160
    %v163 = vld [vmem:[#allocation3] sm:$0xff]
    %v164 = vld [vmem:[#allocation3 + $0x8] sm:$0xff]
    %v165 = vld [vmem:[#allocation3 + $0x10] sm:$0xff]
    %v166 = vld [vmem:[#allocation3 + $0x18] sm:$0xff]
    %v167 = vld [vmem:[#allocation2] sm:$0xff]
    %v168 = vld [vmem:[#allocation2 + $0x8] sm:$0xff]
    %v169 = vld [vmem:[#allocation2 + $0x10] sm:$0xff]
    %v170 = vld [vmem:[#allocation2 + $0x18] sm:$0xff]
    %v171 = vld [vmem:[#allocation2 + $0x20] sm:$0xff]
    %v172 = vld [vmem:[#allocation2 + $0x28] sm:$0xff]
    %v173 = vld [vmem:[#allocation2 + $0x30] sm:$0xff]
    %v174 = vld [vmem:[#allocation2 + $0x38] sm:$0xff]
    %v175 = vld [vmem:[#allocation2 + $0x40] sm:$0xff]
    %v176 = vld [vmem:[#allocation2 + $0x48] sm:$0xff]
    %v177 = vld [vmem:[#allocation2 + $0x50] sm:$0xff]
    %v178 = vld [vmem:[#allocation2 + $0x58] sm:$0xff]
    %v179 = vld [vmem:[#allocation2 + $0x60] sm:$0xff]
    %v180 = vld [vmem:[#allocation2 + $0x68] sm:$0xff]
    %v181 = vld [vmem:[#allocation2 + $0x70] sm:$0xff]
    %v182 = vld [vmem:[#allocation2 + $0x78] sm:$0xff]
    %183 = vmatprep.subr.mxu0 0.0
    %184 = vmatpush1.msra.mxu0 %v167
    %185 = vmatprep.subr.mxu0 0.0
    %186 = vmatpush1.msra.mxu0 %v168
    %187 = vmatprep.subr.mxu0 0.0
    %188 = vmatpush1.msra.mxu0 %v169
    %189 = vmatprep.subr.mxu0 0.0
    %190 = vmatpush1.msra.mxu0 %v170
    %191 = vmatprep.subr.mxu0 0.0
    %192 = vmatpush1.msra.mxu0 %v171
    %193 = vmatprep.subr.mxu0 0.0
    %194 = vmatpush1.msra.mxu0 %v172
    %195 = vmatprep.subr.mxu0 0.0
    %196 = vmatpush1.msra.mxu0 %v173
    %197 = vmatprep.subr.mxu0 0.0
    %198 = vmatpush1.msra.mxu0 %v174
    %199 = vmatprep.subr.mxu0 0.0
    %200 = vmatpush1.msra.mxu0 %v175
    %201 = vmatprep.subr.mxu0 0.0
    %202 = vmatpush1.msra.mxu0 %v176
    %203 = vmatprep.subr.mxu0 0.0
    %204 = vmatpush1.msra.mxu0 %v177
    %205 = vmatprep.subr.mxu0 0.0
    %206 = vmatpush1.msra.mxu0 %v178
    %207 = vmatprep.subr.mxu0 0.0
    %208 = vmatpush1.msra.mxu0 %v179
    %209 = vmatprep.subr.mxu0 0.0
    %210 = vmatpush1.msra.mxu0 %v180
    %211 = vmatprep.subr.mxu0 0.0
    %212 = vmatpush1.msra.mxu0 %v181
    %213 = vmatprep.subr.mxu0 0.0
    %214 = vmatpush1.msra.mxu0 %v182
    %215 = vmatprep.subr.mxu0 0.0
    %216 = vmatpush1.msra.mxu0 0.0
    %217 = vmatprep.subr.mxu0 0.0
    %218 = vmatpush1.msra.mxu0 0.0
    %219 = vmatprep.subr.mxu0 0.0
    %220 = vmatpush1.msra.mxu0 0.0
    %221 = vmatprep.subr.mxu0 0.0
    %222 = vmatpush1.msra.mxu0 0.0
    %223 = vmatprep.subr.mxu0 0.0
    %224 = vmatpush1.msra.mxu0 0.0
    %225 = vmatprep.subr.mxu0 0.0
    %226 = vmatpush1.msra.mxu0 0.0
    %227 = vmatprep.subr.mxu0 0.0
    %228 = vmatpush1.msra.mxu0 0.0
    %229 = vmatprep.subr.mxu0 0.0
    %230 = vmatpush1.msra.mxu0 0.0
    %231 = vmatprep.subr.mxu0 0.0
    %232 = vmatpush1.msra.mxu0 0.0
    %233 = vmatprep.subr.mxu0 0.0
    %234 = vmatpush1.msra.mxu0 0.0
    %235 = vmatprep.subr.mxu0 0.0
    %236 = vmatpush1.msra.mxu0 0.0
    %237 = vmatprep.subr.mxu0 0.0
    %238 = vmatpush1.msra.mxu0 0.0
    %239 = vmatprep.subr.mxu0 0.0
    %240 = vmatpush1.msra.mxu0 0.0
    %241 = vmatprep.subr.mxu0 0.0
    %242 = vmatpush1.msra.mxu0 0.0
    %243 = vmatprep.subr.mxu0 0.0
    %244 = vmatpush1.msra.mxu0 0.0
    %245 = vmatprep.subr.mxu0 0.0
    %246 = vmatpush1.msra.mxu0 0.0
    %247 = vmatprep.mubr.f32.mxu0 0.0
    %248 = vmatmul.mubr.f32.gmra.mrb[0].mxu0 %v163
    %v249 = vpop.f32.mrb[0].mxu0
    %v250 = vadd.f32 0.0, %v249
    %v251 = vpop.f32.mrb[0].mxu0
    %252 = vmatprep.mubr.f32.mxu0 0.0
    %253 = vmatmul.mubr.f32.gmra.mrb[0].mxu0 %v164
    %v254 = vpop.f32.mrb[0].mxu0
    %v255 = vadd.f32 0.0, %v254
    %v256 = vpop.f32.mrb[0].mxu0
    %257 = vmatprep.mubr.f32.mxu0 0.0
    %258 = vmatmul.mubr.f32.gmra.mrb[0].mxu0 %v165
    %v259 = vpop.f32.mrb[0].mxu0
    %v260 = vadd.f32 0.0, %v259
    %v261 = vpop.f32.mrb[0].mxu0
    %262 = vmatprep.mubr.f32.mxu0 0.0
    %263 = vmatmul.mubr.f32.gmra.mrb[0].mxu0 %v166
    %v264 = vpop.f32.mrb[0].mxu0
    %v265 = vadd.f32 0.0, %v264
    %v266 = vpop.f32.mrb[0].mxu0
    %267 = vdwg.mxu0
    %v268 = vand.u32 2147483647, %v250
    %v269 = vand.u32 2147483647, %v255
    %v270 = vand.u32 2147483647, %v260
    %v271 = vand.u32 2147483647, %v265
    %272 = vst [vmem:[#allocation8] sm:$0xff] %v268
    %273 = vst [vmem:[#allocation8 + $0x8] sm:$0xff] %v269
    %274 = vst [vmem:[#allocation8 + $0x10] sm:$0xff] %v270
    %275 = vst [vmem:[#allocation8 + $0x18] sm:$0xff] %v271
    // Predicated region
    $region18: #{tpu_custom_call.1} parent=1 // pred_check
      _
    $region19: #{tpu_custom_call.1} parent=1 // pred_check_branch
      %277 = sbr.rel (0) target = $region21
    $region20: #{tpu_custom_call.1} parent=1 // pred_region
      %s279 = ssub.s32 512, 512
      %280 = vsyncadd [#allocation5], %s279
      %s281 = sshll.u32 [#allocation8], 4
      %s282 = int_to_ptr.vmem [resolvable:$true] %s281
      %287 = dma.vmem_to_hbm [thread:$0]  %s282, 512, %s2, [#allocation5], 128, 128, 8
    $region21: #{tpu_custom_call.1} parent=1 // pred_fallthru
      _
    // Predicated region
    $region22: #{tpu_custom_call.1} parent=1 // pred_check
      _
    $region23: #{tpu_custom_call.1} parent=1 // pred_check_branch
      %289 = sbr.rel (0) target = $region25
    $region24: #{tpu_custom_call.1} parent=1 // pred_region
      %290 = dma.done [#allocation5], 512
    $region25: #{tpu_custom_call.1} parent=1 // pred_fallthru
      _
    %291 = vsyncpa [#allocation4], 1
    %292 = vsyncpa [#allocation7], 1
    %293 = vsyncpa [#allocation5], 1

</llo_original>
